<compile_context>
chip_gen: v5e
topology: v5e:2x2
jax: 0.10.0
libtpu: 0.0.40
codegen_flags: <defaults>
</compile_context>

<pallas_src>
import functools

import jax
import jax.numpy as jnp
from jax.experimental import pallas as pl
from jax.experimental.pallas import tpu as pltpu

_SUBLANE = 8
_LANE = 128
_DEF_TILE_N = 512                       # ~85% of HBM roofline on v6e for streaming tiles
_INPUT_VMEM_BUDGET = 8 * 1024 * 1024    # bytes for the double-buffered input block


def _round_up(x: int, m: int) -> int:
    return (x + m - 1) // m * m


def _validate_features(x: jax.Array, y: jax.Array) -> None:
    """Mirror of piq._validate_features: both 2D, same feature dim, same dtype."""
    assert x.ndim == 2, f"predicted_features must be 2D (N, D), got ndim={x.ndim}"
    assert y.ndim == 2, f"target_features must be 2D (N, D), got ndim={y.ndim}"
    assert x.shape[1] == y.shape[1], (
        f"feature dims must match, got {x.shape[1]} vs {y.shape[1]}"
    )
    assert x.dtype == y.dtype, f"dtypes must match, got {x.dtype} vs {y.dtype}"


def _col_sum_kernel(x_ref, sum_ref, *, n_valid: int, tile_n: int):
    """Accumulate per-feature sums of a (tile_n, D) tile into the (8, D) f32 output block.

    The row reduction is done on the MXU with a selector matrix whose sublane-0 row is
    ones and the rest zeros: the column sums land in row 0 of the accumulator, rows 1..7
    stay exactly zero (folded away for free in the finalize kernel).
    """
    p = pl.program_id(0)          # parallel chunk index
    k = pl.program_id(1)          # tile index within the chunk (reduction axis)

    @pl.when(k == 0)
    def _init():
        sum_ref[...] = jnp.zeros_like(sum_ref)

    tile = x_ref[...]                                                  # (tile_n, D)

    # Mask rows past the true N (covers the Pallas-padded remainder tile and any
    # clamped fully-out-of-range tiles of the parallel decomposition).
    start = (p * pl.num_programs(1) + k) * tile_n
    row_id = jax.lax.broadcasted_iota(jnp.int32, (tile_n, 1), 0) + start
    tile = jnp.where(row_id < n_valid, tile, jnp.zeros_like(tile))

    sel = jax.lax.broadcasted_iota(jnp.int32, (_SUBLANE, tile_n), 0) == 0
    ones_row0 = jnp.where(sel, 1.0, 0.0).astype(tile.dtype)            # (8, tile_n)

    sum_ref[...] += jnp.dot(ones_row0, tile, preferred_element_type=jnp.float32)


def _feature_column_sums(x: jax.Array, n_valid: int, num_parallel: int) -> jax.Array:
    """Streaming per-feature sum of an (N_pad, D_pad) matrix -> (P, 8, D_pad) f32 partials."""
    n_pad, d = x.shape
    itemsize = jnp.dtype(x.dtype).itemsize

    # Tile size: target ~512 rows, capped so the double-buffered input block stays
    # within budget on every generation's default scoped-VMEM limit.
    max_rows = max(_SUBLANE,
                   (_INPUT_VMEM_BUDGET // (2 * d * itemsize)) // _SUBLANE * _SUBLANE)
    tile_n = min(_DEF_TILE_N, max_rows, n_pad)

    num_tiles = pl.cdiv(n_pad, tile_n)
    p = max(1, min(num_parallel, num_tiles))    # parallel chunks (engages both v7x TCs)
    k = pl.cdiv(num_tiles, p)                   # tiles per chunk
    last_tile = num_tiles - 1

    if p * k == num_tiles:
        in_index = lambda pi, ki, _k=k: (pi * _k + ki, 0)
    else:
        # Some (pi, ki) would index past the last tile; clamp the DMA to a valid tile.
        # The kernel masks those rows to zero (their unclamped start >= n_valid).
        in_index = lambda pi, ki, _k=k, _last=last_tile: (
            jnp.minimum(pi * _k + ki, _last), 0)

    kernel = functools.partial(_col_sum_kernel, n_valid=n_valid, tile_n=tile_n)
    return pl.pallas_call(
        kernel,
        out_shape=jax.ShapeDtypeStruct((p, _SUBLANE, d), jnp.float32),
        grid=(p, k),
        in_specs=[pl.BlockSpec((tile_n, d), in_index)],
        out_specs=pl.BlockSpec((None, _SUBLANE, d), lambda pi, ki: (pi, 0, 0)),
        compiler_params=pltpu.CompilerParams(
            dimension_semantics=("parallel", "arbitrary"),
            vmem_limit_bytes=32 * 1024 * 1024,
        ),
        cost_estimate=pl.CostEstimate(
            flops=2 * _SUBLANE * n_pad * d,
            transcendentals=0,
            bytes_accessed=n_pad * d * itemsize + p * _SUBLANE * d * 4,
        ),
    )(x)


def _finalize_kernel(ps_ref, ts_ref, out_ref, *, inv_n_pred: float, inv_n_tgt: float):
    """mean diff + sum of squares from the (P, 8, D) partial sums -> scalar."""
    # Fold the (small, static) parallel-chunk axis with an unrolled Python loop; rows
    # 1..7 of each partial block are exactly zero, so diff*diff over the full (8, D)
    # slab only picks up the true per-feature means' contribution.
    p_sum = ps_ref[0]
    for i in range(1, ps_ref.shape[0]):
        p_sum = p_sum + ps_ref[i]
    t_sum = ts_ref[0]
    for i in range(1, ts_ref.shape[0]):
        t_sum = t_sum + ts_ref[i]

    diff = p_sum * inv_n_pred - t_sum * inv_n_tgt          # (8, D)
    out_ref[0, 0] = jnp.sum(diff * diff)


def base_feature_metric_forward(predicted_features: jax.Array,
                                target_features: jax.Array,
                                *, num_parallel: int = 2) -> jax.Array:
    """Pallas equivalent of BaseFeatureMetric.forward."""
    _validate_features(predicted_features, target_features)

    d = predicted_features.shape[1]
    d_pad = _round_up(max(d, 1), _LANE)

    def _prep(x):
        n = x.shape[0]
        n_pad = _round_up(max(n, 1), _SUBLANE)
        if n_pad != n or d_pad != d:
            # Zero padding: padded rows/columns contribute nothing to sums or the metric.
            x = jnp.pad(x, ((0, n_pad - n), (0, d_pad - d)))
        return x, n

    xp, n_pred = _prep(predicted_features)
    xt, n_tgt = _prep(target_features)

    pred_sums = _feature_column_sums(xp, n_pred, num_parallel)
    tgt_sums = _feature_column_sums(xt, n_tgt, num_parallel)

    finalize = functools.partial(
        _finalize_kernel, inv_n_pred=1.0 / n_pred, inv_n_tgt=1.0 / n_tgt)
    out = pl.pallas_call(
        finalize,
        out_shape=jax.ShapeDtypeStruct((1, 1), jnp.float32),
        in_specs=[pl.BlockSpec(memory_space=pltpu.MemorySpace.VMEM),
                  pl.BlockSpec(memory_space=pltpu.MemorySpace.VMEM)],
        out_specs=pl.BlockSpec(memory_space=pltpu.MemorySpace.SMEM),
    )(pred_sums, tgt_sums)

    # Metric is a 0-d scalar, matching the torch convention of returning a scalar tensor.
    return out[0, 0]


def _reference_metric(x: jax.Array, y: jax.Array) -> jax.Array:
    xf = x.astype(jnp.float32)
    yf = y.astype(jnp.float32)
    return jnp.sum((jnp.mean(xf, axis=0) - jnp.mean(yf, axis=0)) ** 2)


if __name__ == "__main__":
    key = jax.random.PRNGKey(0)
    k1, k2, k3, k4 = jax.random.split(key, 4)

    # Small, module-consistent shapes: (N, D) per-image feature descriptors.
    n_pred, n_tgt, d = 8, 8, 64
    predicted_features = jax.random.normal(k1, (n_pred, d), dtype=jnp.float32)
    target_features = jax.random.normal(k2, (n_tgt, d), dtype=jnp.float32) + 0.5

    metric = base_feature_metric_forward(predicted_features, target_features)
    jax.block_until_ready(metric)
    ref = _reference_metric(predicted_features, target_features)
    assert jnp.allclose(metric, ref, rtol=1e-5, atol=1e-5), (metric, ref)

    # Second check: exercises the tiled grid, parallel chunks, remainder masking and
    # bf16 streaming (N=1050 not a multiple of the 512-row tile, two parallel chunks).
    n2p, n2t, d2 = 1050, 900, 256
    xp2 = jax.random.normal(k3, (n2p, d2), dtype=jnp.float32).astype(jnp.bfloat16)
    xt2 = (jax.random.normal(k4, (n2t, d2), dtype=jnp.float32) + 0.25).astype(jnp.bfloat16)
    metric2 = base_feature_metric_forward(xp2, xt2)
    jax.block_until_ready(metric2)
    ref2 = _reference_metric(xp2, xt2)
    assert jnp.allclose(metric2, ref2, rtol=1e-3, atol=1e-3), (metric2, ref2)

    print("KERNEL_OK")
</pallas_src>

<mosaic_0001>
module attributes {stable_mosaic.version = 11 : i64} {
  func.func @_col_sum_kernel(%arg0: i32, %arg1: i32, %arg2: memref<8x128xf32, #tpu.memory_space<vmem>>, %arg3: memref<1x8x128xf32, #tpu.memory_space<vmem>>) attributes {dimension_semantics = [#tpu.dimension_semantics<parallel>, #tpu.dimension_semantics<arbitrary>], iteration_bounds = array<i64: 1, 1>, scalar_prefetch = 0 : i64, scratch_operands = 0 : i64, tpu.core_type = #tpu.core_type<tc>, window_params = [{transform_indices = @transform_0, window_bounds = array<i64: 8, 128>}, {transform_indices = @transform_1, window_bounds = array<i64: 1, 8, 128>}]} {
    %c0_i32 = arith.constant 0 : i32
    %0 = arith.cmpi eq, %arg1, %c0_i32 : i32
    %1 = arith.extui %0 : i1 to i32
    %c0_i32_0 = arith.constant 0 : i32
    %2 = arith.cmpi ne, %1, %c0_i32_0 : i32
    scf.if %2 {
      %cst_13 = arith.constant 0.000000e+00 : f32
      %29 = vector.broadcast %cst_13 : f32 to vector<8x128xf32>
      %c0_14 = arith.constant 0 : index
      %c0_15 = arith.constant 0 : index
      %c0_16 = arith.constant 0 : index
      %30 = vector.load %arg3[%c0_14, %c0_15, %c0_16] : memref<1x8x128xf32, #tpu.memory_space<vmem>>, vector<1x8x128xf32>
      %31 = vector.shape_cast %30 : vector<1x8x128xf32> to vector<8x128xf32>
      %32 = vector.shape_cast %29 : vector<8x128xf32> to vector<1x8x128xf32>
      tpu.vector_store %arg3[%c0_14, %c0_15, %c0_16], %32 {strides = array<i32>} : memref<1x8x128xf32, #tpu.memory_space<vmem>>, vector<1x8x128xf32>,
    } else {
    }
    %c0 = arith.constant 0 : index
    %c0_1 = arith.constant 0 : index
    %3 = vector.load %arg2[%c0, %c0_1] : memref<8x128xf32, #tpu.memory_space<vmem>>, vector<8x128xf32>
    %c1_i32 = arith.constant 1 : i32
    %4 = arith.muli %arg0, %c1_i32 : i32
    %5 = arith.addi %4, %arg1 : i32
    %c8_i32 = arith.constant 8 : i32
    %6 = arith.muli %5, %c8_i32 : i32
    %7 = tpu.iota {dimensions = array<i32: 0>} : vector<8x1xi32>
    %8 = vector.broadcast %6 : i32 to vector<8x1xi32>
    %9 = arith.addi %7, %8 : vector<8x1xi32>
    %c8_i32_2 = arith.constant 8 : i32
    %10 = vector.broadcast %c8_i32_2 : i32 to vector<8x1xi32>
    %11 = arith.cmpi slt, %9, %10 : vector<8x1xi32>
    %cst = arith.constant 0.000000e+00 : f32
    %12 = vector.broadcast %cst : f32 to vector<8x128xf32>
    %13 = vector.shape_cast %11 : vector<8x1xi1> to vector<8x1xi1>
    %14 = vector.broadcast %13 : vector<8x1xi1> to vector<8x128xi1>
    %15 = arith.select %14, %3, %12 : vector<8x128xi1>, vector<8x128xf32>
    %16 = tpu.iota {dimensions = array<i32: 0>} : vector<8x8xi32>
    %c0_i32_3 = arith.constant 0 : i32
    %17 = vector.broadcast %c0_i32_3 : i32 to vector<8x8xi32>
    %18 = arith.cmpi eq, %16, %17 : vector<8x8xi32>
    %cst_4 = arith.constant 1.000000e+00 : f32
    %cst_5 = arith.constant 0.000000e+00 : f32
    %19 = vector.broadcast %cst_4 : f32 to vector<8x8xf32>
    %20 = vector.broadcast %cst_5 : f32 to vector<8x8xf32>
    %21 = arith.select %18, %19, %20 : vector<8x8xi1>, vector<8x8xf32>
    %c0_6 = arith.constant 0 : index
    %c0_7 = arith.constant 0 : index
    %c0_8 = arith.constant 0 : index
    %22 = vector.load %arg3[%c0_6, %c0_7, %c0_8] : memref<1x8x128xf32, #tpu.memory_space<vmem>>, vector<1x8x128xf32>
    %23 = vector.shape_cast %22 : vector<1x8x128xf32> to vector<8x128xf32>
    %cst_9 = arith.constant dense<0.000000e+00> : vector<8x128xf32>
    %24 = tpu.matmul %21, %15, %cst_9 {dimension_numbers = #tpu.dot_dimension_numbers<[1], [0], [0], [1], [0, 0, 1, 1], [], []>} : vector<8x8xf32>, vector<8x128xf32>, vector<8x128xf32> -> vector<8x128xf32>
    %25 = arith.addf %23, %24 : vector<8x128xf32>
    %c0_10 = arith.constant 0 : index
    %c0_11 = arith.constant 0 : index
    %c0_12 = arith.constant 0 : index
    %26 = vector.load %arg3[%c0_10, %c0_11, %c0_12] : memref<1x8x128xf32, #tpu.memory_space<vmem>>, vector<1x8x128xf32>
    %27 = vector.shape_cast %26 : vector<1x8x128xf32> to vector<8x128xf32>
    %28 = vector.shape_cast %25 : vector<8x128xf32> to vector<1x8x128xf32>
    tpu.vector_store %arg3[%c0_10, %c0_11, %c0_12], %28 {strides = array<i32>} : memref<1x8x128xf32, #tpu.memory_space<vmem>>, vector<1x8x128xf32>,
    return
  }
  func.func @transform_0(%arg0: i32, %arg1: i32) -> (i32, i32) {
    %c1_i32 = arith.constant 1 : i32
    %0 = arith.muli %arg0, %c1_i32 : i32
    %1 = arith.addi %0, %arg1 : i32
    %c0_i32 = arith.constant 0 : i32
    %c0_i32_0 = arith.constant 0 : i32
    return %1, %c0_i32 : i32, i32
  }
  func.func @transform_1(%arg0: i32, %arg1: i32) -> (i32, i32, i32) {
    %c0_i32 = arith.constant 0 : i32
    %c0_i32_0 = arith.constant 0 : i32
    %c0_i32_1 = arith.constant 0 : i32
    return %arg0, %c0_i32, %c0_i32_0 : i32, i32, i32
  }
}

</mosaic_0001>

<llo_original>
// kernel: tpu_custom_call.1
$region0: #{tpu_custom_call.1}
  #allocation0 [shape = 'u32[]', space=smem, size = 0x4, offset = 0x4, fixed_abs, tag = 'smem constant byte address 0x4 - core index']
  #allocation1 [shape = 'u32[72,128]{1,0:T(1,128)}', space=vmem, size = 0x9000, scoped, tag = 'internal scratch']
  %s0 = inlined_call_operand.hbm [shape: f32[8,128], index: 0, kind: input, shape index: {}]
  %s1 = inlined_call_operand.hbm [shape: f32[1,8,128], index: 1, kind: output, shape index: {}]
  %s2 = sld [smem:[#allocation0]]
  $region22: #{tpu_custom_call.1} parent=0
    _
  %s4 = ssub.s32 1, %s2
  %s5 = scalar_select 0, %s4, %s2
  $region1: #{tpu_custom_call.1} parent=0
    #allocation2 [shape = 'u8[4096]{0}', space=vmem, size = 0x1000, scoped, tag = 'input window, operand 0, single buffered']
    #allocation3 [shape = 's32[1]{0}', space=sflag, size = 0x4, scoped, tag = 'scoped memory for tpu_custom_call.1']
    #allocation4 [shape = 's32[1]{0}', space=sflag, size = 0x4, scoped, tag = 'scoped memory for tpu_custom_call.1']
    #allocation5 [shape = 'u8[4096]{0}', space=vmem, size = 0x1000, scoped, tag = 'output window, operand 0, single buffered']
    %6 = vsyncpa [#allocation3], 0
    %7 = vsyncpa [#allocation4], 0
    // Predicated region
    $region2: #{tpu_custom_call.1} parent=1 // pred_check
      _
    $region3: #{tpu_custom_call.1} parent=1 // pred_check_branch
      %9 = sbr.rel (0) target = $region5
    $region4: #{tpu_custom_call.1} parent=1 // pred_region
      %s10 = sadd.s32 0, 0
      %12 = vsyncadd [#allocation3], 0
      %s13 = smul.addr %s10, 8
      %s14 = scalar_lea.hbm %s0, %s13
      %s16 = sshll.u32 %s14, 4
      %s17 = int_to_ptr.hbm [resolvable:$true] %s16
      %s18 = sshll.u32 [#allocation2], 4
      %s19 = int_to_ptr.vmem [resolvable:$true] %s18
      %21 = dma.hbm_to_vmem [thread:$0]  %s17, 128, %s19, [#allocation3]
    $region5: #{tpu_custom_call.1} parent=1 // pred_fallthru
      _
    // Predicated region
    $region6: #{tpu_custom_call.1} parent=1 // pred_check
      _
    $region7: #{tpu_custom_call.1} parent=1 // pred_check_branch
      %23 = sbr.rel (0) target = $region9
    $region8: #{tpu_custom_call.1} parent=1 // pred_region
      %25 = dma.done [#allocation3], 128
    $region9: #{tpu_custom_call.1} parent=1 // pred_fallthru
      _
    %s26 = sadd.s32 0, 0
    %p27 = scmp.eq.s32.totalorder 0, 0
    // Predicated region
    $region10: #{tpu_custom_call.1} parent=1 // pred_check
      %p28 = pneg %p27
    $region11: #{tpu_custom_call.1} parent=1 // pred_check_branch
      %30 = sbr.rel (%p28) target = $region13
    $region12: #{tpu_custom_call.1} parent=1 // pred_region
      %31 = vst [vmem:[#allocation5] sm:$0xff] 0.0
    $region13: #{tpu_custom_call.1} parent=1 // pred_fallthru
      _
    %v32 = vld [vmem:[#allocation2] sm:$0xff]
    %s33 = sadd.s32 0, 0
    %s34 = smul.u32 %s33, 8
    %v35 = vlaneseq
    %v36 = vshrl.u32 %v35, 7
    %v37 = vstv %s34
    %v38 = vadd.s32 %v36, %v37
    %vm39 = vcmp.lt.s32.totalorder %v38, 8
    %v40 = vsel %vm39, 1, 0
    %vm41 = vcmp.eq.s32.totalorder %v40, 1
    %v42 = vsel %vm41, %v32, 0.0
    %vm43 = vcmp.eq.s32.totalorder %v36, 0
    %v44 = vsel %vm43, 1.0, 0.0
    %v45 = vld [vmem:[#allocation5] sm:$0xff]
    %vm46 = vcmask 64512
    %v48 = vsel %vm46, %v44, 0
    %50 = vmatpush.msra.mxu0 0.0
    %51 = vmatpush.msra.mxu0 0.0
    %52 = vmatpush.msra.mxu0 0.0
    %53 = vmatpush.msra.mxu0 0.0
    %54 = vmatpush.msra.mxu0 0.0
    %55 = vmatpush.msra.mxu0 0.0
    %56 = vmatpush.msra.mxu0 0.0
    %57 = vmatpush.msra.mxu0 0.0
    %58 = vmatpush.msra.mxu0 0.0
    %59 = vmatpush.msra.mxu0 0.0
    %60 = vmatpush.msra.mxu0 0.0
    %61 = vmatpush.msra.mxu0 0.0
    %62 = vmatpush.msra.mxu0 0.0
    %63 = vmatpush.msra.mxu0 0.0
    %64 = vmatpush.msra.mxu0 0.0
    %65 = vmatpush.msra.mxu0 %v42
    %66 = vmatmul.f32.gmra.mxu0 %v48
    %v67 = vpop.f32.mrf.mxu0
    %v68 = vadd.f32 0.0, %v67
    %69 = vdwg.mxu0
    %v70 = vadd.f32 %v45, %v68
    %71 = vst [vmem:[#allocation5] sm:$0xff] %v70
    // Predicated region
    $region14: #{tpu_custom_call.1} parent=1 // pred_check
      _
    $region15: #{tpu_custom_call.1} parent=1 // pred_check_branch
      %73 = sbr.rel (0) target = $region17
    $region16: #{tpu_custom_call.1} parent=1 // pred_region
      %75 = vsyncadd [#allocation4], 0
      %s77 = sshll.u32 [#allocation5], 4
      %s78 = int_to_ptr.vmem [resolvable:$true] %s77
      %s79 = sshll.u32 %s1, 4
      %s80 = int_to_ptr.hbm [resolvable:$true] %s79
      %82 = dma.vmem_to_hbm [thread:$0]  %s78, 128, %s80, [#allocation4]
    $region17: #{tpu_custom_call.1} parent=1 // pred_fallthru
      _
    // Predicated region
    $region18: #{tpu_custom_call.1} parent=1 // pred_check
      _
    $region19: #{tpu_custom_call.1} parent=1 // pred_check_branch
      %84 = sbr.rel (0) target = $region21
    $region20: #{tpu_custom_call.1} parent=1 // pred_region
      %86 = dma.done [#allocation4], 128
    $region21: #{tpu_custom_call.1} parent=1 // pred_fallthru
      _
    %87 = vsyncpa [#allocation3], 1
    %88 = vsyncpa [#allocation4], 1

</llo_original>
